<compile_context>
chip_gen: v7x
topology: tpu7x:2x2x1
jax: 0.10.0
libtpu: 0.0.40
codegen_flags: <defaults>
</compile_context>

<pallas_src>
import functools

import jax
import jax.numpy as jnp
from jax.experimental import pallas as pl
from jax.experimental.pallas import tpu as pltpu

BN_EPS = 1e-5


def fused_finetune_kernel(x_ref, wproj_ref, w1_ref, s1_ref, b1_ref, w2_ref, b2_ref,
                          o_ref, *, t_steps):
    """Backbone (channel proj + full-series max pool) -> Linear -> BN(eval) -> ReLU -> Linear."""
    # TODO(synk): Dropout(0.3) layers are eval-mode identities (no RNG masking emitted).
    tm = o_ref.shape[0]
    d_in = wproj_ref.shape[1]

    # Backbone 'full_series' encode: one small MXU contraction over channels, then a
    # max-reduce over time.  x block is (TM*T, C_in) bf16; accumulate in f32.
    p = jnp.dot(x_ref[...], wproj_ref[...],
                preferred_element_type=jnp.float32)            # (TM*T, D_in) f32
    feats = jnp.max(p.reshape(tm, t_steps, d_in), axis=1)      # (TM, D_in)   f32

    # Classifier head (eval).  BN mean/beta are folded into b1 offline; the BN scale is
    # applied as an f32 broadcast multiply so the bf16 w1 mantissa stays scale-free.
    h = jnp.dot(feats.astype(jnp.bfloat16), w1_ref[...],
                preferred_element_type=jnp.float32) * s1_ref[...] + b1_ref[...]
    h = jnp.maximum(h, 0.0)                                     # ReLU (f32, VPU)
    o_ref[...] = (jnp.dot(h.astype(jnp.bfloat16), w2_ref[...],
                          preferred_element_type=jnp.float32)
                  + b2_ref[...]).astype(o_ref.dtype)            # lane-dense bf16 store


def fold_and_pad_params(params, num_classes, lane_pad=128):
    """Offline parameter prep (outside the hot path).

    - Eval-mode BatchNorm1d: s = gamma * rsqrt(var + eps) kept as a separate f32 scale,
      b1' = (b1 - mean) * s + beta folded into an f32 bias.  (w1 is NOT pre-scaled so
      its bf16 representation is unaffected by the BN scale magnitude.)
    - Zero-pad the second Linear's output dim to a lane-dense multiple of 128.
    - Matmul weights stored bf16; scales/biases stay f32.
    """
    s = params["gamma"] * jax.lax.rsqrt(params["var"] + BN_EPS)           # (1, H) f32
    b1f = (params["b1"] - params["mean"]) * s + params["beta"]            # (1, H) f32

    hidden = params["w2"].shape[0]
    c_pad = max(lane_pad, ((num_classes + lane_pad - 1) // lane_pad) * lane_pad)
    w2p = jnp.zeros((hidden, c_pad), jnp.float32).at[:, :num_classes].set(params["w2"])
    b2p = jnp.zeros((1, c_pad), jnp.float32).at[:, :num_classes].set(params["b2"])

    return {
        "w_proj": params["w_proj"].astype(jnp.bfloat16),   # (C_in, D_in) bf16
        "w1": params["w1"].astype(jnp.bfloat16),           # (D_in, H)    bf16
        "s1": s,                                           # (1, H)       f32 BN scale
        "b1": b1f,                                         # (1, H)       f32 BN-folded bias
        "w2": w2p.astype(jnp.bfloat16),                    # (H, 128)     bf16 lane-padded
        "b2": b2p,                                         # (1, 128)     f32 lane-padded
    }


@functools.partial(jax.jit, static_argnames=("num_classes",))
def finetuning_forward(x, prepped, num_classes):
    """x: (B, T, C_in) raw series -> (B, num_classes) f32 logits, one fused Pallas kernel."""
    B, T, C = x.shape
    D_in = prepped["w_proj"].shape[1]
    H = prepped["w1"].shape[1]
    c_pad = prepped["w2"].shape[1]

    # Batch tile: large enough to amortize the ~0.35us per-step overhead (2048-row cap
    # keeps double-buffered tiles ~3-6 MiB, far under v7x's 64 MiB VMEM); additionally
    # capped at ceil(B/2) rounded to a multiple of 8 so the "parallel" grid has >=2
    # steps for v7x's two TensorCores whenever B is big enough.
    half = max(8, ((pl.cdiv(B, 2) + 7) // 8) * 8)
    TM = min(B, half, 2048)
    grid = (pl.cdiv(B, TM),)

    # bf16 activation stream for the kernel (HBM-bound at large B); the reshape merges
    # the leading (B, T) dims only, so it is layout-free and fuses with the cast.
    x2d = x.reshape(B * T, C).astype(jnp.bfloat16)

    out = pl.pallas_call(
        functools.partial(fused_finetune_kernel, t_steps=T),
        out_shape=jax.ShapeDtypeStruct((B, c_pad), jnp.bfloat16),
        grid_spec=pltpu.PrefetchScalarGridSpec(
            num_scalar_prefetch=0,
            grid=grid,
            in_specs=[
                # activations: tiled over batch (TM batch rows == TM*T flat rows)
                pl.BlockSpec((TM * T, C), lambda i: (i, 0)),
                # weights / scales / biases: same block every step -> VMEM-resident
                pl.BlockSpec((C, D_in), lambda i: (0, 0)),
                pl.BlockSpec((D_in, H), lambda i: (0, 0)),
                pl.BlockSpec((1, H), lambda i: (0, 0)),
                pl.BlockSpec((1, H), lambda i: (0, 0)),
                pl.BlockSpec((H, c_pad), lambda i: (0, 0)),
                pl.BlockSpec((1, c_pad), lambda i: (0, 0)),
            ],
            out_specs=pl.BlockSpec((TM, c_pad), lambda i: (i, 0)),
        ),
        compiler_params=pltpu.CompilerParams(
            dimension_semantics=("parallel",),      # batch axis -> shard across TCs (v7x)
        ),
    )(x2d, prepped["w_proj"], prepped["w1"], prepped["s1"], prepped["b1"],
      prepped["w2"], prepped["b2"])

    # Drop lane padding and return f32 logits (tiny fused slice/cast inside the jit).
    return out[:, :num_classes].astype(jnp.float32)


def synthetic_backbone_encode(x, w_proj):
    """Pure-JAX reference of backbone.encode(x, encoding_window='full_series').

    TODO(synk): the real backbone is an arbitrary frozen nn.Module; replaced here by a
    deterministic frozen channel projection + full-series max pool (TS2Vec-style).
    """
    h = jnp.einsum("btc,cd->btd", x, w_proj)
    return jnp.max(h, axis=1)                       # (B, D_in)


def init_params(key, c_in, backbone_out_dims, hidden, num_classes):
    ks = jax.random.split(key, 5)
    return {
        "w_proj": jax.random.normal(ks[0], (c_in, backbone_out_dims), jnp.float32) * 0.1,
        "w1": jax.random.normal(ks[1], (backbone_out_dims, hidden), jnp.float32)
              * (1.0 / jnp.sqrt(backbone_out_dims)),
        "b1": jnp.zeros((1, hidden), jnp.float32),
        "gamma": jnp.ones((1, hidden), jnp.float32),
        "beta": jnp.zeros((1, hidden), jnp.float32),
        # deterministic non-trivial running stats
        "mean": 0.01 * jnp.arange(hidden, dtype=jnp.float32).reshape(1, hidden),
        "var": jnp.ones((1, hidden), jnp.float32) * 0.5,
        "w2": jax.random.normal(ks[2], (hidden, num_classes), jnp.float32)
              * (1.0 / jnp.sqrt(hidden)),
        "b2": jax.random.normal(ks[3], (1, num_classes), jnp.float32) * 0.01,
    }


if __name__ == "__main__":
    # Small shapes: batch=8, time=16, channels=4; backbone_out_dims=32, num_classes=10.
    B, T, C_IN = 8, 16, 4
    BACKBONE_OUT_DIMS, HIDDEN, NUM_CLASSES = 32, 256, 10

    key = jax.random.PRNGKey(0)
    k_x, k_p = jax.random.split(key)
    x = jax.random.normal(k_x, (B, T, C_IN), jnp.float32)
    params = init_params(k_p, C_IN, BACKBONE_OUT_DIMS, HIDDEN, NUM_CLASSES)

    prepped = fold_and_pad_params(params, NUM_CLASSES)
    out = jax.block_until_ready(finetuning_forward(x, prepped, num_classes=NUM_CLASSES))

    # Pure-JAX f32 reference of the full eval forward (unfolded BN, unpadded output).
    feats = synthetic_backbone_encode(x, params["w_proj"])
    h_ref = feats @ params["w1"] + params["b1"]
    h_ref = (h_ref - params["mean"]) * jax.lax.rsqrt(params["var"] + BN_EPS) \
            * params["gamma"] + params["beta"]
    h_ref = jnp.maximum(h_ref, 0.0)
    ref = h_ref @ params["w2"] + params["b2"]

    assert out.shape == (B, NUM_CLASSES)
    # bf16 activation / weight / output streams (f32 accumulation everywhere) -> loosened
    # tolerance vs the pure-f32 reference.
    assert jnp.allclose(out, ref, atol=4e-2, rtol=4e-2), float(jnp.max(jnp.abs(out - ref)))

    print("KERNEL_OK")
</pallas_src>

<mosaic_0001>
module attributes {stable_mosaic.version = 11 : i64} {
  func.func @fused_finetune_kernel(%arg0: i32, %arg1: memref<128x4xbf16, #tpu.memory_space<vmem>>, %arg2: memref<4x32xbf16, #tpu.memory_space<vmem>>, %arg3: memref<32x256xbf16, #tpu.memory_space<vmem>>, %arg4: memref<1x256xf32, #tpu.memory_space<vmem>>, %arg5: memref<1x256xf32, #tpu.memory_space<vmem>>, %arg6: memref<256x128xbf16, #tpu.memory_space<vmem>>, %arg7: memref<1x128xf32, #tpu.memory_space<vmem>>, %arg8: memref<8x128xbf16, #tpu.memory_space<vmem>>) attributes {dimension_semantics = [#tpu.dimension_semantics<parallel>], iteration_bounds = array<i64: 1>, scalar_prefetch = 0 : i64, scratch_operands = 0 : i64, tpu.core_type = #tpu.core_type<tc>, window_params = [{transform_indices = @transform_0, window_bounds = array<i64: 128, 4>}, {pipeline_mode = #tpu.pipeline_mode<synchronous>, transform_indices = @transform_1, window_bounds = array<i64: 4, 32>}, {pipeline_mode = #tpu.pipeline_mode<synchronous>, transform_indices = @transform_2, window_bounds = array<i64: 32, 256>}, {pipeline_mode = #tpu.pipeline_mode<synchronous>, transform_indices = @transform_3, window_bounds = array<i64: 1, 256>}, {pipeline_mode = #tpu.pipeline_mode<synchronous>, transform_indices = @transform_4, window_bounds = array<i64: 1, 256>}, {pipeline_mode = #tpu.pipeline_mode<synchronous>, transform_indices = @transform_5, window_bounds = array<i64: 256, 128>}, {pipeline_mode = #tpu.pipeline_mode<synchronous>, transform_indices = @transform_6, window_bounds = array<i64: 1, 128>}, {transform_indices = @transform_7, window_bounds = array<i64: 8, 128>}]} {
    %c0 = arith.constant 0 : index
    %c0_0 = arith.constant 0 : index
    %0 = vector.load %arg1[%c0, %c0_0] : memref<128x4xbf16, #tpu.memory_space<vmem>>, vector<128x4xbf16>
    %c0_1 = arith.constant 0 : index
    %c0_2 = arith.constant 0 : index
    %1 = vector.load %arg2[%c0_1, %c0_2] : memref<4x32xbf16, #tpu.memory_space<vmem>>, vector<4x32xbf16>
    %cst = arith.constant dense<0.000000e+00> : vector<128x32xf32>
    %2 = tpu.matmul %0, %1, %cst {dimension_numbers = #tpu.dot_dimension_numbers<[1], [0], [0], [1], [0, 0, 1, 1], [], []>} : vector<128x4xbf16>, vector<4x32xbf16>, vector<128x32xf32> -> vector<128x32xf32>
    %3 = vector.shape_cast %2 : vector<128x32xf32> to vector<8x16x32xf32>
    %cst_3 = arith.constant dense<0xFF800000> : vector<8x32xf32>
    %4 = vector.multi_reduction <maximumf>, %3, %cst_3 [1] : vector<8x16x32xf32> to vector<8x32xf32>
    %5 = arith.truncf %4 : vector<8x32xf32> to vector<8x32xbf16>
    %c0_4 = arith.constant 0 : index
    %c0_5 = arith.constant 0 : index
    %6 = vector.load %arg3[%c0_4, %c0_5] : memref<32x256xbf16, #tpu.memory_space<vmem>>, vector<32x256xbf16>
    %cst_6 = arith.constant dense<0.000000e+00> : vector<8x256xf32>
    %7 = tpu.matmul %5, %6, %cst_6 {dimension_numbers = #tpu.dot_dimension_numbers<[1], [0], [0], [1], [0, 0, 1, 1], [], []>} : vector<8x32xbf16>, vector<32x256xbf16>, vector<8x256xf32> -> vector<8x256xf32>
    %c0_7 = arith.constant 0 : index
    %c0_8 = arith.constant 0 : index
    %8 = vector.load %arg4[%c0_7, %c0_8] : memref<1x256xf32, #tpu.memory_space<vmem>>, vector<1x256xf32>
    %9 = vector.broadcast %8 : vector<1x256xf32> to vector<8x256xf32>
    %10 = arith.mulf %7, %9 : vector<8x256xf32>
    %c0_9 = arith.constant 0 : index
    %c0_10 = arith.constant 0 : index
    %11 = vector.load %arg5[%c0_9, %c0_10] : memref<1x256xf32, #tpu.memory_space<vmem>>, vector<1x256xf32>
    %12 = vector.broadcast %11 : vector<1x256xf32> to vector<8x256xf32>
    %13 = arith.addf %10, %12 : vector<8x256xf32>
    %cst_11 = arith.constant 0.000000e+00 : f32
    %14 = vector.broadcast %cst_11 : f32 to vector<8x256xf32>
    %15 = arith.maximumf %13, %14 : vector<8x256xf32>
    %16 = arith.truncf %15 : vector<8x256xf32> to vector<8x256xbf16>
    %c0_12 = arith.constant 0 : index
    %c0_13 = arith.constant 0 : index
    %17 = vector.load %arg6[%c0_12, %c0_13] : memref<256x128xbf16, #tpu.memory_space<vmem>>, vector<256x128xbf16>
    %cst_14 = arith.constant dense<0.000000e+00> : vector<8x128xf32>
    %18 = tpu.matmul %16, %17, %cst_14 {dimension_numbers = #tpu.dot_dimension_numbers<[1], [0], [0], [1], [0, 0, 1, 1], [], []>} : vector<8x256xbf16>, vector<256x128xbf16>, vector<8x128xf32> -> vector<8x128xf32>
    %c0_15 = arith.constant 0 : index
    %c0_16 = arith.constant 0 : index
    %19 = vector.load %arg7[%c0_15, %c0_16] : memref<1x128xf32, #tpu.memory_space<vmem>>, vector<1x128xf32>
    %20 = vector.broadcast %19 : vector<1x128xf32> to vector<8x128xf32>
    %21 = arith.addf %18, %20 : vector<8x128xf32>
    %22 = arith.truncf %21 : vector<8x128xf32> to vector<8x128xbf16>
    %c0_17 = arith.constant 0 : index
    %c0_18 = arith.constant 0 : index
    %23 = vector.load %arg8[%c0_17, %c0_18] : memref<8x128xbf16, #tpu.memory_space<vmem>>, vector<8x128xbf16>
    tpu.vector_store %arg8[%c0_17, %c0_18], %22 {strides = array<i32>} : memref<8x128xbf16, #tpu.memory_space<vmem>>, vector<8x128xbf16>,
    return
  }
  func.func @transform_0(%arg0: i32) -> (i32, i32) {
    %c0_i32 = arith.constant 0 : i32
    %c0_i32_0 = arith.constant 0 : i32
    return %arg0, %c0_i32 : i32, i32
  }
  func.func @transform_1(%arg0: i32) -> (i32, i32) {
    %c0_i32 = arith.constant 0 : i32
    %c0_i32_0 = arith.constant 0 : i32
    %c0_i32_1 = arith.constant 0 : i32
    return %c0_i32, %c0_i32_0 : i32, i32
  }
  func.func @transform_2(%arg0: i32) -> (i32, i32) {
    %c0_i32 = arith.constant 0 : i32
    %c0_i32_0 = arith.constant 0 : i32
    %c0_i32_1 = arith.constant 0 : i32
    return %c0_i32, %c0_i32_0 : i32, i32
  }
  func.func @transform_3(%arg0: i32) -> (i32, i32) {
    %c0_i32 = arith.constant 0 : i32
    %c0_i32_0 = arith.constant 0 : i32
    %c0_i32_1 = arith.constant 0 : i32
    return %c0_i32, %c0_i32_0 : i32, i32
  }
  func.func @transform_4(%arg0: i32) -> (i32, i32) {
    %c0_i32 = arith.constant 0 : i32
    %c0_i32_0 = arith.constant 0 : i32
    %c0_i32_1 = arith.constant 0 : i32
    return %c0_i32, %c0_i32_0 : i32, i32
  }
  func.func @transform_5(%arg0: i32) -> (i32, i32) {
    %c0_i32 = arith.constant 0 : i32
    %c0_i32_0 = arith.constant 0 : i32
    %c0_i32_1 = arith.constant 0 : i32
    return %c0_i32, %c0_i32_0 : i32, i32
  }
  func.func @transform_6(%arg0: i32) -> (i32, i32) {
    %c0_i32 = arith.constant 0 : i32
    %c0_i32_0 = arith.constant 0 : i32
    %c0_i32_1 = arith.constant 0 : i32
    return %c0_i32, %c0_i32_0 : i32, i32
  }
  func.func @transform_7(%arg0: i32) -> (i32, i32) {
    %c0_i32 = arith.constant 0 : i32
    %c0_i32_0 = arith.constant 0 : i32
    return %arg0, %c0_i32 : i32, i32
  }
}

</mosaic_0001>

<llo_original>
// kernel: finetuning_forward.1
$region0: #{finetuning_forward.1}
  #allocation0 [shape = 'u32[]', space=smem, size = 0x4, offset = 0x4, fixed_abs, tag = 'smem constant byte address 0x4 - core index']
  #allocation1 [shape = 'u32[144,128]{1,0:T(1,128)}', space=vmem, size = 0x12000, scoped, tag = 'internal scratch']
  %s0 = inlined_call_operand.vmem [shape: bf16[128,4], index: 0, kind: input, shape index: {}]
  %s1 = inlined_call_operand.vmem [shape: bf16[4,32], index: 1, kind: input, shape index: {}]
  %s2 = inlined_call_operand.hbm [shape: bf16[32,256], index: 2, kind: input, shape index: {}]
  %s3 = inlined_call_operand.vmem [shape: f32[1,256], index: 3, kind: input, shape index: {}]
  %s4 = inlined_call_operand.vmem [shape: f32[1,256], index: 4, kind: input, shape index: {}]
  %s5 = inlined_call_operand.vmem [shape: bf16[256,128], index: 5, kind: input, shape index: {}]
  %s6 = inlined_call_operand.vmem [shape: f32[1,128], index: 6, kind: input, shape index: {}]
  %s7 = inlined_call_operand.vmem [shape: bf16[8,128], index: 7, kind: output, shape index: {}]
  %s8 = sld [smem:[#allocation0]]
  $region42: #{finetuning_forward.1} parent=0
    _
  %s10 = ssub.s32 1, %s8
  %s11 = scalar_select 0, %s10, %s8
  $region1: #{finetuning_forward.1} parent=0
    #allocation2 [shape = 'u8[16384]{0}', space=vmem, size = 0x4000, scoped, tag = 'input window, operand 2, single buffered']
    #allocation3 [shape = 's32[1]{0}', space=sflag, size = 0x4, scoped, tag = 'scoped memory for finetuning_forward.1']
    %12 = vsyncpa [#allocation3], 0
    // Predicated region
    $region2: #{finetuning_forward.1} parent=1 // pred_check
      _
    $region3: #{finetuning_forward.1} parent=1 // pred_check_branch
      %14 = sbr.rel (0) target = $region5
    $region4: #{finetuning_forward.1} parent=1 // pred_region
      _
    $region5: #{finetuning_forward.1} parent=1 // pred_fallthru
      _
    // Predicated region
    $region6: #{finetuning_forward.1} parent=1 // pred_check
      _
    $region7: #{finetuning_forward.1} parent=1 // pred_check_branch
      %16 = sbr.rel (0) target = $region9
    $region8: #{finetuning_forward.1} parent=1 // pred_region
      _
    $region9: #{finetuning_forward.1} parent=1 // pred_fallthru
      _
    // Predicated region
    $region10: #{finetuning_forward.1} parent=1 // pred_check
      _
    $region11: #{finetuning_forward.1} parent=1 // pred_check_branch
      %18 = sbr.rel (0) target = $region13
    $region12: #{finetuning_forward.1} parent=1 // pred_region
      %s20 = ssub.s32 512, 512
      %21 = vsyncadd [#allocation3], %s20
      %s22 = sshll.u32 [#allocation2], 4
      %s23 = int_to_ptr.vmem [resolvable:$true] %s22
      %28 = dma.hbm_to_vmem [thread:$0]  %s2, 512, %s23, [#allocation3], 128, 128, 8
    $region13: #{finetuning_forward.1} parent=1 // pred_fallthru
      _
    // Predicated region
    $region14: #{finetuning_forward.1} parent=1 // pred_check
      _
    $region15: #{finetuning_forward.1} parent=1 // pred_check_branch
      %30 = sbr.rel (0) target = $region17
    $region16: #{finetuning_forward.1} parent=1 // pred_region
      _
    $region17: #{finetuning_forward.1} parent=1 // pred_fallthru
      _
    // Predicated region
    $region18: #{finetuning_forward.1} parent=1 // pred_check
      _
    $region19: #{finetuning_forward.1} parent=1 // pred_check_branch
      %32 = sbr.rel (0) target = $region21
    $region20: #{finetuning_forward.1} parent=1 // pred_region
      _
    $region21: #{finetuning_forward.1} parent=1 // pred_fallthru
      _
    // Predicated region
    $region22: #{finetuning_forward.1} parent=1 // pred_check
      _
    $region23: #{finetuning_forward.1} parent=1 // pred_check_branch
      %34 = sbr.rel (0) target = $region25
    $region24: #{finetuning_forward.1} parent=1 // pred_region
      _
    $region25: #{finetuning_forward.1} parent=1 // pred_fallthru
      _
    // Predicated region
    $region26: #{finetuning_forward.1} parent=1 // pred_check
      _
    $region27: #{finetuning_forward.1} parent=1 // pred_check_branch
      %36 = sbr.rel (0) target = $region29
    $region28: #{finetuning_forward.1} parent=1 // pred_region
      _
    $region29: #{finetuning_forward.1} parent=1 // pred_fallthru
      _
    // Predicated region
    $region30: #{finetuning_forward.1} parent=1 // pred_check
      _
    $region31: #{finetuning_forward.1} parent=1 // pred_check_branch
      %38 = sbr.rel (0) target = $region33
    $region32: #{finetuning_forward.1} parent=1 // pred_region
      %39 = dma.done [#allocation3], 512
    $region33: #{finetuning_forward.1} parent=1 // pred_fallthru
      _
    %v41 = vld [vmem:[%s0] sm:$0xf]
    %v42 = vld [vmem:[%s0 + $0x4] sm:$0xf]
    %v43 = vld [vmem:[%s0 + $0x8] sm:$0xf]
    %v44 = vld [vmem:[%s0 + $0xc] sm:$0xf]
    %v45 = vld [vmem:[%s0 + $0x10] sm:$0xf]
    %v46 = vld [vmem:[%s0 + $0x14] sm:$0xf]
    %v47 = vld [vmem:[%s0 + $0x18] sm:$0xf]
    %v48 = vld [vmem:[%s0 + $0x1c] sm:$0xf]
    %v49 = vld [vmem:[%s0 + $0x20] sm:$0xf]
    %v50 = vld [vmem:[%s0 + $0x24] sm:$0xf]
    %v51 = vld [vmem:[%s0 + $0x28] sm:$0xf]
    %v52 = vld [vmem:[%s0 + $0x2c] sm:$0xf]
    %v53 = vld [vmem:[%s0 + $0x30] sm:$0xf]
    %v54 = vld [vmem:[%s0 + $0x34] sm:$0xf]
    %v55 = vld [vmem:[%s0 + $0x38] sm:$0xf]
    %v56 = vld [vmem:[%s0 + $0x3c] sm:$0xf]
    %v57 = vld [vmem:[%s1] sm:$0x3]
    %v74 = vunpack.c.l.b16 %v41
    %v75 = vunpack.c.l.b16 %v42
    %v76 = vunpack.c.l.b16 %v43
    %v77 = vunpack.c.l.b16 %v44
    %v78 = vunpack.c.l.b16 %v45
    %v79 = vunpack.c.l.b16 %v46
    %v80 = vunpack.c.l.b16 %v47
    %v81 = vunpack.c.l.b16 %v48
    %v82 = vunpack.c.l.b16 %v49
    %v83 = vunpack.c.l.b16 %v50
    %v84 = vunpack.c.l.b16 %v51
    %v85 = vunpack.c.l.b16 %v52
    %v86 = vunpack.c.l.b16 %v53
    %v87 = vunpack.c.l.b16 %v54
    %v88 = vunpack.c.l.b16 %v55
    %v89 = vunpack.c.l.b16 %v56
    %v90 = vpack.c.b16 %v75, %v74
    %v91 = vpack.c.b16 %v77, %v76
    %v92 = vpack.c.b16 %v79, %v78
    %v93 = vpack.c.b16 %v81, %v80
    %v94 = vpack.c.b16 %v83, %v82
    %v95 = vpack.c.b16 %v85, %v84
    %v96 = vpack.c.b16 %v87, %v86
    %v97 = vpack.c.b16 %v89, %v88
    %vm98 = vcmask 31744
    %v100 = vsel %vm98, %v90, 0
    %v103 = vsel %vm98, %v91, 0
    %v106 = vsel %vm98, %v92, 0
    %v109 = vsel %vm98, %v93, 0
    %v112 = vsel %vm98, %v94, 0
    %v115 = vsel %vm98, %v95, 0
    %v118 = vsel %vm98, %v96, 0
    %v121 = vsel %vm98, %v97, 0
    %vm123 = vcmask 1041408
    %v125 = vsel %vm123, %v57, 0
    %127 = vmatprep.subr.bf16.mxu0 0
    %128 = vmatpush1.bf16.msra.mxu0 %v125
    %129 = vmatprep.subr.bf16.mxu0 0
    %130 = vmatpush1.bf16.msra.mxu0 0
    %131 = vmatprep.subr.bf16.mxu0 0
    %132 = vmatpush1.bf16.msra.mxu0 0
    %133 = vmatprep.subr.bf16.mxu0 0
    %134 = vmatpush1.bf16.msra.mxu0 0
    %135 = vmatprep.subr.bf16.mxu0 0
    %136 = vmatpush1.bf16.msra.mxu0 0
    %137 = vmatprep.subr.bf16.mxu0 0
    %138 = vmatpush1.bf16.msra.mxu0 0
    %139 = vmatprep.subr.bf16.mxu0 0
    %140 = vmatpush1.bf16.msra.mxu0 0
    %141 = vmatprep.subr.bf16.mxu0 0
    %142 = vmatpush1.bf16.msra.mxu0 0
    %143 = vmatprep.subr.bf16.mxu0 0
    %144 = vmatpush1.bf16.msra.mxu0 0
    %145 = vmatprep.subr.bf16.mxu0 0
    %146 = vmatpush1.bf16.msra.mxu0 0
    %147 = vmatprep.subr.bf16.mxu0 0
    %148 = vmatpush1.bf16.msra.mxu0 0
    %149 = vmatprep.subr.bf16.mxu0 0
    %150 = vmatpush1.bf16.msra.mxu0 0
    %151 = vmatprep.subr.bf16.mxu0 0
    %152 = vmatpush1.bf16.msra.mxu0 0
    %153 = vmatprep.subr.bf16.mxu0 0
    %154 = vmatpush1.bf16.msra.mxu0 0
    %155 = vmatprep.subr.bf16.mxu0 0
    %156 = vmatpush1.bf16.msra.mxu0 0
    %157 = vmatprep.subr.bf16.mxu0 0
    %158 = vmatpush1.bf16.msra.mxu0 0
    %159 = vmatprep.mubr.bf16.mxu0 0
    %160 = vmatmul.mubr.bf16.gmra.mrb[0].mxu0 %v100
    %v161 = vpop.f32.mrb[0].mxu0
    %v162 = vadd.f32 0.0, %v161
    %v163 = vpop.f32.mrb[0].mxu0
    %v164 = vpop.f32.mrb[0].mxu0
    %v165 = vadd.f32 0.0, %v164
    %v166 = vpop.f32.mrb[0].mxu0
    %167 = vmatprep.mubr.bf16.mxu0 0
    %168 = vmatmul.mubr.bf16.gmra.mrb[0].mxu0 %v103
    %v169 = vpop.f32.mrb[0].mxu0
    %v170 = vadd.f32 0.0, %v169
    %v171 = vpop.f32.mrb[0].mxu0
    %v172 = vpop.f32.mrb[0].mxu0
    %v173 = vadd.f32 0.0, %v172
    %v174 = vpop.f32.mrb[0].mxu0
    %175 = vmatprep.mubr.bf16.mxu0 0
    %176 = vmatmul.mubr.bf16.gmra.mrb[0].mxu0 %v106
    %v177 = vpop.f32.mrb[0].mxu0
    %v178 = vadd.f32 0.0, %v177
    %v179 = vpop.f32.mrb[0].mxu0
    %v180 = vpop.f32.mrb[0].mxu0
    %v181 = vadd.f32 0.0, %v180
    %v182 = vpop.f32.mrb[0].mxu0
    %183 = vmatprep.mubr.bf16.mxu0 0
    %184 = vmatmul.mubr.bf16.gmra.mrb[0].mxu0 %v109
    %v185 = vpop.f32.mrb[0].mxu0
    %v186 = vadd.f32 0.0, %v185
    %v187 = vpop.f32.mrb[0].mxu0
    %v188 = vpop.f32.mrb[0].mxu0
    %v189 = vadd.f32 0.0, %v188
    %v190 = vpop.f32.mrb[0].mxu0
    %191 = vmatprep.mubr.bf16.mxu0 0
    %192 = vmatmul.mubr.bf16.gmra.mrb[0].mxu0 %v112
    %v193 = vpop.f32.mrb[0].mxu0
    %v194 = vadd.f32 0.0, %v193
    %v195 = vpop.f32.mrb[0].mxu0
    %v196 = vpop.f32.mrb[0].mxu0
    %v197 = vadd.f32 0.0, %v196
    %v198 = vpop.f32.mrb[0].mxu0
    %199 = vmatprep.mubr.bf16.mxu0 0
    %200 = vmatmul.mubr.bf16.gmra.mrb[0].mxu0 %v115
    %v201 = vpop.f32.mrb[0].mxu0
    %v202 = vadd.f32 0.0, %v201
    %v203 = vpop.f32.mrb[0].mxu0
    %v204 = vpop.f32.mrb[0].mxu0
    %v205 = vadd.f32 0.0, %v204
    %v206 = vpop.f32.mrb[0].mxu0
    %207 = vmatprep.mubr.bf16.mxu0 0
    %208 = vmatmul.mubr.bf16.gmra.mrb[0].mxu0 %v118
    %v209 = vpop.f32.mrb[0].mxu0
    %v210 = vadd.f32 0.0, %v209
    %v211 = vpop.f32.mrb[0].mxu0
    %v212 = vpop.f32.mrb[0].mxu0
    %v213 = vadd.f32 0.0, %v212
    %v214 = vpop.f32.mrb[0].mxu0
    %215 = vmatprep.mubr.bf16.mxu0 0
    %216 = vmatmul.mubr.bf16.gmra.mrb[0].mxu0 %v121
    %v217 = vpop.f32.mrb[0].mxu0
    %v218 = vadd.f32 0.0, %v217
    %v219 = vpop.f32.mrb[0].mxu0
    %v220 = vpop.f32.mrb[0].mxu0
    %v221 = vadd.f32 0.0, %v220
    %v222 = vpop.f32.mrb[0].mxu0
    %223 = vdwg.mxu0
    %vm224 = vcmask 261120
    %v225 = vsel %vm224, %v162, -inf
    %v226 = vsel %vm224, %v165, -inf
    %v227 = vmax.f32 %v225, %v226
    %v228 = vrot.slane %v227, 4
    %v229 = vmax.f32 %v227, %v228
    %v230 = vrot.slane %v229, 2
    %v231 = vmax.f32 %v229, %v230
    %v232 = vrot.slane %v231, 1
    %v233 = vmax.f32 %v231, %v232
    %v234 = vsel %vm224, %v170, -inf
    %v235 = vsel %vm224, %v173, -inf
    %v236 = vmax.f32 %v234, %v235
    %v237 = vrot.slane %v236, 4
    %v238 = vmax.f32 %v236, %v237
    %v239 = vrot.slane %v238, 2
    %v240 = vmax.f32 %v238, %v239
    %v241 = vrot.slane %v240, 1
    %v242 = vmax.f32 %v240, %v241
    %v243 = vsel %vm224, %v178, -inf
    %v244 = vsel %vm224, %v181, -inf
    %v245 = vmax.f32 %v243, %v244
    %v246 = vrot.slane %v245, 4
    %v247 = vmax.f32 %v245, %v246
    %v248 = vrot.slane %v247, 2
    %v249 = vmax.f32 %v247, %v248
    %v250 = vrot.slane %v249, 1
    %v251 = vmax.f32 %v249, %v250
    %v252 = vsel %vm224, %v186, -inf
    %v253 = vsel %vm224, %v189, -inf
    %v254 = vmax.f32 %v252, %v253
    %v255 = vrot.slane %v254, 4
    %v256 = vmax.f32 %v254, %v255
    %v257 = vrot.slane %v256, 2
    %v258 = vmax.f32 %v256, %v257
    %v259 = vrot.slane %v258, 1
    %v260 = vmax.f32 %v258, %v259
    %v261 = vsel %vm224, %v194, -inf
    %v262 = vsel %vm224, %v197, -inf
    %v263 = vmax.f32 %v261, %v262
    %v264 = vrot.slane %v263, 4
    %v265 = vmax.f32 %v263, %v264
    %v266 = vrot.slane %v265, 2
    %v267 = vmax.f32 %v265, %v266
    %v268 = vrot.slane %v267, 1
    %v269 = vmax.f32 %v267, %v268
    %v270 = vsel %vm224, %v202, -inf
    %v271 = vsel %vm224, %v205, -inf
    %v272 = vmax.f32 %v270, %v271
    %v273 = vrot.slane %v272, 4
    %v274 = vmax.f32 %v272, %v273
    %v275 = vrot.slane %v274, 2
    %v276 = vmax.f32 %v274, %v275
    %v277 = vrot.slane %v276, 1
    %v278 = vmax.f32 %v276, %v277
    %v279 = vsel %vm224, %v210, -inf
    %v280 = vsel %vm224, %v213, -inf
    %v281 = vmax.f32 %v279, %v280
    %v282 = vrot.slane %v281, 4
    %v283 = vmax.f32 %v281, %v282
    %v284 = vrot.slane %v283, 2
    %v285 = vmax.f32 %v283, %v284
    %v286 = vrot.slane %v285, 1
    %v287 = vmax.f32 %v285, %v286
    %v288 = vsel %vm224, %v218, -inf
    %v289 = vsel %vm224, %v221, -inf
    %v290 = vmax.f32 %v288, %v289
    %v291 = vrot.slane %v290, 4
    %v292 = vmax.f32 %v290, %v291
    %v293 = vrot.slane %v292, 2
    %v294 = vmax.f32 %v292, %v293
    %v295 = vrot.slane %v294, 1
    %v296 = vmax.f32 %v294, %v295
    %v297 = vpack.c.bf16 %v233, %v233
    %v298 = vpack.c.bf16 %v242, %v242
    %v299 = vpack.c.bf16 %v251, %v251
    %v300 = vpack.c.bf16 %v260, %v260
    %v301 = vpack.c.bf16 %v269, %v269
    %v302 = vpack.c.bf16 %v278, %v278
    %v303 = vpack.c.bf16 %v287, %v287
    %v304 = vpack.c.bf16 %v296, %v296
    %v305 = vld [vmem:[#allocation2] sm:$0xff]
    %v306 = vld [vmem:[#allocation2 + $0x8] sm:$0xff]
    %v307 = vld [vmem:[#allocation2 + $0x10] sm:$0xff]
    %v308 = vld [vmem:[#allocation2 + $0x18] sm:$0xff]
    %v317 = vunpack.c.l.b16 %v297
    %v318 = vunpack.c.l.b16 %v298
    %v319 = vunpack.c.l.b16 %v299
    %v320 = vunpack.c.l.b16 %v300
    %v321 = vunpack.c.l.b16 %v301
    %v322 = vunpack.c.l.b16 %v302
    %v323 = vunpack.c.l.b16 %v303
    %v324 = vunpack.c.l.b16 %v304
    %vm325 = vcmask 1041409
    %v326 = vsel %vm325, %v318, %v317
    %vm327 = vcmask 1042434
    %v328 = vsel %vm327, %v319, %v326
    %vm329 = vcmask 1043459
    %v330 = vsel %vm329, %v320, %v328
    %vm331 = vcmask 1044484
    %v332 = vsel %vm331, %v321, %v330
    %vm333 = vcmask 1045509
    %v334 = vsel %vm333, %v322, %v332
    %vm335 = vcmask 1046534
    %v336 = vsel %vm335, %v323, %v334
    %vm337 = vcmask 1047559
    %v338 = vsel %vm337, %v324, %v336
    %v339 = vpack.c.b16 %v338, %v338
    %v344 = vunpack.c.l.b16 %v305
    %v345 = vunpack.c.h.b16 %v305
    %v346 = vunpack.c.l.b16 %v306
    %v347 = vunpack.c.h.b16 %v306
    %v348 = vunpack.c.l.b16 %v307
    %v349 = vunpack.c.h.b16 %v307
    %v350 = vunpack.c.l.b16 %v308
    %v351 = vunpack.c.h.b16 %v308
    %v352 = vpack.c.b16 %v346, %v344
    %v353 = vpack.c.b16 %v347, %v345
    %v354 = vpack.c.b16 %v350, %v348
    %v355 = vpack.c.b16 %v351, %v349
    %v361 = vsel %vm224, %v339, 0
    %363 = vmatprep.subr.bf16.mxu0 %v353
    %364 = vmatpush1.bf16.msra.mxu0 %v352
    %365 = vmatprep.subr.bf16.mxu0 %v355
    %366 = vmatpush1.bf16.msra.mxu0 %v354
    %367 = vmatprep.subr.bf16.mxu0 0
    %368 = vmatpush1.bf16.msra.mxu0 0
    %369 = vmatprep.subr.bf16.mxu0 0
    %370 = vmatpush1.bf16.msra.mxu0 0
    %371 = vmatprep.subr.bf16.mxu0 0
    %372 = vmatpush1.bf16.msra.mxu0 0
    %373 = vmatprep.subr.bf16.mxu0 0
    %374 = vmatpush1.bf16.msra.mxu0 0
    %375 = vmatprep.subr.bf16.mxu0 0
    %376 = vmatpush1.bf16.msra.mxu0 0
    %377 = vmatprep.subr.bf16.mxu0 0
    %378 = vmatpush1.bf16.msra.mxu0 0
    %379 = vmatprep.subr.bf16.mxu0 0
    %380 = vmatpush1.bf16.msra.mxu0 0
    %381 = vmatprep.subr.bf16.mxu0 0
    %382 = vmatpush1.bf16.msra.mxu0 0
    %383 = vmatprep.subr.bf16.mxu0 0
    %384 = vmatpush1.bf16.msra.mxu0 0
    %385 = vmatprep.subr.bf16.mxu0 0
    %386 = vmatpush1.bf16.msra.mxu0 0
    %387 = vmatprep.subr.bf16.mxu0 0
    %388 = vmatpush1.bf16.msra.mxu0 0
    %389 = vmatprep.subr.bf16.mxu0 0
    %390 = vmatpush1.bf16.msra.mxu0 0
    %391 = vmatprep.subr.bf16.mxu0 0
    %392 = vmatpush1.bf16.msra.mxu0 0
    %393 = vmatprep.subr.bf16.mxu0 0
    %394 = vmatpush1.bf16.msra.mxu0 0
    %395 = vmatprep.mubr.bf16.mxu0 0
    %396 = vmatmul.mubr.bf16.gmra.mrb[0].mxu0 %v361
    %v397 = vpop.f32.mrb[0].mxu0
    %v398 = vadd.f32 0.0, %v397
    %v399 = vpop.f32.mrb[0].mxu0
    %v400 = vadd.f32 0.0, %v399
    %v401 = vpop.f32.mrb[0].mxu0
    %v402 = vpop.f32.mrb[0].mxu0
    %403 = vdwg.mxu0
    %v404 = vld [vmem:[%s3] sm:$0x3]
    %v406 = vlaneseq
    %v407 = vshrl.u32 %v406, 7
    %v408 = vsub.s32 0, %v407
    %v409 = vrot.slane %v404, %v408
    %v410 = vlaneseq
    %v411 = vshrl.u32 %v410, 7
    %v412 = vsub.s32 1, %v411
    %v413 = vrot.slane %v404, %v412
    %v416 = vmul.f32 %v398, %v409
    %v417 = vmul.f32 %v400, %v413
    %v418 = vld [vmem:[%s4] sm:$0x3]
    %v420 = vlaneseq
    %v421 = vshrl.u32 %v420, 7
    %v422 = vsub.s32 0, %v421
    %v423 = vrot.slane %v418, %v422
    %v424 = vlaneseq
    %v425 = vshrl.u32 %v424, 7
    %v426 = vsub.s32 1, %v425
    %v427 = vrot.slane %v418, %v426
    %v430 = vadd.f32 %v416, %v423
    %v431 = vadd.f32 %v417, %v427
    %v432 = vmax.f32 %v430, 0.0
    %v433 = vmax.f32 %v431, 0.0
    %v434 = vpack.c.bf16 %v432, %v432
    %v435 = vpack.c.bf16 %v433, %v433
    %v436 = vld [vmem:[%s5] sm:$0xf]
    %v437 = vld [vmem:[%s5 + $0x4] sm:$0xf]
    %v438 = vld [vmem:[%s5 + $0x8] sm:$0xf]
    %v439 = vld [vmem:[%s5 + $0xc] sm:$0xf]
    %v440 = vld [vmem:[%s5 + $0x10] sm:$0xf]
    %v441 = vld [vmem:[%s5 + $0x14] sm:$0xf]
    %v442 = vld [vmem:[%s5 + $0x18] sm:$0xf]
    %v443 = vld [vmem:[%s5 + $0x1c] sm:$0xf]
    %v444 = vld [vmem:[%s5 + $0x20] sm:$0xf]
    %v445 = vld [vmem:[%s5 + $0x24] sm:$0xf]
    %v446 = vld [vmem:[%s5 + $0x28] sm:$0xf]
    %v447 = vld [vmem:[%s5 + $0x2c] sm:$0xf]
    %v448 = vld [vmem:[%s5 + $0x30] sm:$0xf]
    %v449 = vld [vmem:[%s5 + $0x34] sm:$0xf]
    %v450 = vld [vmem:[%s5 + $0x38] sm:$0xf]
    %v451 = vld [vmem:[%s5 + $0x3c] sm:$0xf]
    %v452 = vld [vmem:[%s5 + $0x40] sm:$0xf]
    %v453 = vld [vmem:[%s5 + $0x44] sm:$0xf]
    %v454 = vld [vmem:[%s5 + $0x48] sm:$0xf]
    %v455 = vld [vmem:[%s5 + $0x4c] sm:$0xf]
    %v456 = vld [vmem:[%s5 + $0x50] sm:$0xf]
    %v457 = vld [vmem:[%s5 + $0x54] sm:$0xf]
    %v458 = vld [vmem:[%s5 + $0x58] sm:$0xf]
    %v459 = vld [vmem:[%s5 + $0x5c] sm:$0xf]
    %v460 = vld [vmem:[%s5 + $0x60] sm:$0xf]
    %v461 = vld [vmem:[%s5 + $0x64] sm:$0xf]
    %v462 = vld [vmem:[%s5 + $0x68] sm:$0xf]
    %v463 = vld [vmem:[%s5 + $0x6c] sm:$0xf]
    %v464 = vld [vmem:[%s5 + $0x70] sm:$0xf]
    %v465 = vld [vmem:[%s5 + $0x74] sm:$0xf]
    %v466 = vld [vmem:[%s5 + $0x78] sm:$0xf]
    %v467 = vld [vmem:[%s5 + $0x7c] sm:$0xf]
    %v468 = vld [vmem:[%s6] sm:$0x1]
    %v470 = vlaneseq
    %v471 = vshrl.u32 %v470, 7
    %v472 = vsub.s32 0, %v471
    %v473 = vrot.slane %v468, %v472
    %v507 = vunpack.c.l.b16 %v436
    %v508 = vunpack.c.l.b16 %v437
    %v509 = vunpack.c.l.b16 %v438
    %v510 = vunpack.c.l.b16 %v439
    %v511 = vunpack.c.l.b16 %v440
    %v512 = vunpack.c.l.b16 %v441
    %v513 = vunpack.c.l.b16 %v442
    %v514 = vunpack.c.l.b16 %v443
    %v515 = vunpack.c.l.b16 %v444
    %v516 = vunpack.c.l.b16 %v445
    %v517 = vunpack.c.l.b16 %v446
    %v518 = vunpack.c.l.b16 %v447
    %v519 = vunpack.c.l.b16 %v448
    %v520 = vunpack.c.l.b16 %v449
    %v521 = vunpack.c.l.b16 %v450
    %v522 = vunpack.c.l.b16 %v451
    %v523 = vunpack.c.l.b16 %v452
    %v524 = vunpack.c.l.b16 %v453
    %v525 = vunpack.c.l.b16 %v454
    %v526 = vunpack.c.l.b16 %v455
    %v527 = vunpack.c.l.b16 %v456
    %v528 = vunpack.c.l.b16 %v457
    %v529 = vunpack.c.l.b16 %v458
    %v530 = vunpack.c.l.b16 %v459
    %v531 = vunpack.c.l.b16 %v460
    %v532 = vunpack.c.l.b16 %v461
    %v533 = vunpack.c.l.b16 %v462
    %v534 = vunpack.c.l.b16 %v463
    %v535 = vunpack.c.l.b16 %v464
    %v536 = vunpack.c.l.b16 %v465
    %v537 = vunpack.c.l.b16 %v466
    %v538 = vunpack.c.l.b16 %v467
    %v539 = vpack.c.b16 %v508, %v507
    %v540 = vpack.c.b16 %v510, %v509
    %v541 = vpack.c.b16 %v512, %v511
    %v542 = vpack.c.b16 %v514, %v513
    %v543 = vpack.c.b16 %v516, %v515
    %v544 = vpack.c.b16 %v518, %v517
    %v545 = vpack.c.b16 %v520, %v519
    %v546 = vpack.c.b16 %v522, %v521
    %v547 = vpack.c.b16 %v524, %v523
    %v548 = vpack.c.b16 %v526, %v525
    %v549 = vpack.c.b16 %v528, %v527
    %v550 = vpack.c.b16 %v530, %v529
    %v551 = vpack.c.b16 %v532, %v531
    %v552 = vpack.c.b16 %v534, %v533
    %v553 = vpack.c.b16 %v536, %v535
    %v554 = vpack.c.b16 %v538, %v537
    %571 = vmatprep.subr.bf16.mxu0 0
    %572 = vmatpush1.bf16.msra.mxu0 %v539
    %573 = vmatprep.subr.bf16.mxu0 0
    %574 = vmatpush1.bf16.msra.mxu0 %v540
    %575 = vmatprep.subr.bf16.mxu0 0
    %576 = vmatpush1.bf16.msra.mxu0 %v541
    %577 = vmatprep.subr.bf16.mxu0 0
    %578 = vmatpush1.bf16.msra.mxu0 %v542
    %579 = vmatprep.subr.bf16.mxu0 0
    %580 = vmatpush1.bf16.msra.mxu0 %v543
    %581 = vmatprep.subr.bf16.mxu0 0
    %582 = vmatpush1.bf16.msra.mxu0 %v544
    %583 = vmatprep.subr.bf16.mxu0 0
    %584 = vmatpush1.bf16.msra.mxu0 %v545
    %585 = vmatprep.subr.bf16.mxu0 0
    %586 = vmatpush1.bf16.msra.mxu0 %v546
    %587 = vmatprep.subr.bf16.mxu0 0
    %588 = vmatpush1.bf16.msra.mxu0 %v547
    %589 = vmatprep.subr.bf16.mxu0 0
    %590 = vmatpush1.bf16.msra.mxu0 %v548
    %591 = vmatprep.subr.bf16.mxu0 0
    %592 = vmatpush1.bf16.msra.mxu0 %v549
    %593 = vmatprep.subr.bf16.mxu0 0
    %594 = vmatpush1.bf16.msra.mxu0 %v550
    %595 = vmatprep.subr.bf16.mxu0 0
    %596 = vmatpush1.bf16.msra.mxu0 %v551
    %597 = vmatprep.subr.bf16.mxu0 0
    %598 = vmatpush1.bf16.msra.mxu0 %v552
    %599 = vmatprep.subr.bf16.mxu0 0
    %600 = vmatpush1.bf16.msra.mxu0 %v553
    %601 = vmatprep.subr.bf16.mxu0 0
    %602 = vmatpush1.bf16.msra.mxu0 %v554
    %603 = vmatprep.mubr.bf16.mxu0 %v435
    %604 = vmatmul.mubr.bf16.gmra.mrb[0].mxu0 %v434
    %v605 = vpop.f32.mrb[0].mxu0
    %v606 = vadd.f32 %v473, %v605
    %v607 = vpop.f32.mrb[0].mxu0
    %v608 = vpop.f32.mrb[0].mxu0
    %v609 = vpop.f32.mrb[0].mxu0
    %610 = vdwg.mxu0
    %v611 = vpack.c.bf16 %v606, %v606
    %612 = vst [vmem:[%s7] sm:$0xf] %v611
    // Predicated region
    $region34: #{finetuning_forward.1} parent=1 // pred_check
      _
    $region35: #{finetuning_forward.1} parent=1 // pred_check_branch
      %614 = sbr.rel (0) target = $region37
    $region36: #{finetuning_forward.1} parent=1 // pred_region
      _
    $region37: #{finetuning_forward.1} parent=1 // pred_fallthru
      _
    // Predicated region
    $region38: #{finetuning_forward.1} parent=1 // pred_check
      _
    $region39: #{finetuning_forward.1} parent=1 // pred_check_branch
      %616 = sbr.rel (0) target = $region41
    $region40: #{finetuning_forward.1} parent=1 // pred_region
      _
    $region41: #{finetuning_forward.1} parent=1 // pred_fallthru
      _
    %617 = vsyncpa [#allocation3], 1

</llo_original>
